<compile_context>
chip_gen: v7x
topology: tpu7x:2x2x1
jax: 0.10.0
libtpu: 0.0.40
codegen_flags: <defaults>
</compile_context>

<pallas_src>
import functools

import jax
import jax.numpy as jnp
from jax.experimental import pallas as pl
from jax.experimental.pallas import tpu as pltpu


def _autoencoder_kernel(x_ref, w1_ref, b1_ref, w2_ref, b2_ref,
                        enc_ref, dec_ref):
    # x_ref: (in_dim, B_tile) — lane-dense along the batch (last) axis.
    x = x_ref[...]

    # enc = tanh(W1 @ X + b1)  -> (hid_dim, B_tile), f32 accumulation on MXU.
    enc = jnp.tanh(
        jnp.dot(w1_ref[...], x, preferred_element_type=jnp.float32)
        + b1_ref[...]
    )
    enc_ref[...] = enc.astype(enc_ref.dtype)

    # dec = tanh(W2 @ enc + b2) -> (out_dim, B_tile)
    dec = jnp.tanh(
        jnp.dot(w2_ref[...], enc.astype(x.dtype),
                preferred_element_type=jnp.float32)
        + b2_ref[...]
    )
    dec_ref[...] = dec.astype(dec_ref.dtype)


def _round_up(x, m):
    return ((x + m - 1) // m) * m


def _pick_b_tile():
    """Per-generation default batch tile (lane axis), multiple of 128.

    Double-buffered streaming footprint is (8+4+8)*bt*4B*2 = 160*bt bytes:
      v5e: bt=32768  ->  ~5.2 MB  (16 MiB scoped-VMEM default)
      v6e: bt=65536  -> ~10.5 MB  (32 MiB scoped default)
      v7x: bt=131072 -> ~21.0 MB  (32 MiB scoped default, 64 MiB physical)
    """
    kind = ""
    try:
        kind = jax.devices()[0].device_kind.lower()
    except Exception:
        pass
    if "v5 lite" in kind or "v5lite" in kind or "v5e" in kind:
        return 32768
    if "v7" in kind:
        return 131072
    return 65536  # v6e and safe default for anything else


@functools.partial(jax.jit, static_argnames=("b_tile",))
def autoencoder_forward(x, w_enc, b_enc, w_dec, b_dec, *, b_tile=None):
    """x: (B, 8); w_enc: (4, 8); b_enc: (4,); w_dec: (8, 4); b_dec: (8,).

    Returns (encoded (B, 4), decoded (B, 8)) — matching the PyTorch module.
    """
    B, in_dim = x.shape
    hid_dim = w_enc.shape[0]     # 4
    out_dim = w_dec.shape[0]     # 8

    # ---- batch tiling: large, lane-dense tiles; >=2 grid steps when possible
    bt_req = _pick_b_tile() if b_tile is None else max(128, (int(b_tile) // 128) * 128)
    b_rounded = _round_up(B, 128)
    bt = min(bt_req, b_rounded)
    if b_rounded >= 256:
        # Keep at least 2 grid steps so the parallel batch axis can shard
        # across both TensorCores (v7x megacore); balance the tiles.
        n_tiles = max(2, pl.cdiv(b_rounded, bt))
        bt = _round_up(pl.cdiv(b_rounded, n_tiles), 128)
    n_tiles = pl.cdiv(b_rounded, bt)
    B_pad = n_tiles * bt
    grid = (n_tiles,)

    # ---- glue (fused under jit): feature-major layout + zero-pad the batch
    xT = x.T                                      # (in_dim, B)
    if B_pad != B:
        xT = jnp.pad(xT, ((0, 0), (0, B_pad - B)))
    b1 = b_enc.reshape(hid_dim, 1)
    b2 = b_dec.reshape(out_dim, 1)

    itemsize = jnp.dtype(x.dtype).itemsize
    weight_bytes = (w_enc.size + b_enc.size + w_dec.size + b_dec.size) * itemsize
    cost = pl.CostEstimate(
        flops=2 * B_pad * (in_dim * hid_dim + hid_dim * out_dim),
        transcendentals=B_pad * (hid_dim + out_dim),
        bytes_accessed=B_pad * (in_dim + hid_dim + out_dim) * itemsize + weight_bytes,
    )

    encT, decT = pl.pallas_call(
        _autoencoder_kernel,
        out_shape=(
            jax.ShapeDtypeStruct((hid_dim, B_pad), x.dtype),
            jax.ShapeDtypeStruct((out_dim, B_pad), x.dtype),
        ),
        grid=grid,
        in_specs=[
            # Streaming batch tiles (auto double-buffered by the pipeline).
            pl.BlockSpec((in_dim, bt), lambda i: (0, i)),
            # Weights / biases: constant index_map -> resident in VMEM.
            pl.BlockSpec((hid_dim, in_dim), lambda i: (0, 0)),
            pl.BlockSpec((hid_dim, 1), lambda i: (0, 0)),
            pl.BlockSpec((out_dim, hid_dim), lambda i: (0, 0)),
            pl.BlockSpec((out_dim, 1), lambda i: (0, 0)),
        ],
        out_specs=(
            pl.BlockSpec((hid_dim, bt), lambda i: (0, i)),
            pl.BlockSpec((out_dim, bt), lambda i: (0, i)),
        ),
        compiler_params=pltpu.CompilerParams(
            dimension_semantics=("parallel",),
        ),
        cost_estimate=cost,
    )(xT, w_enc, b1, w_dec, b2)

    # Back to PyTorch (batch-major) convention, dropping the pad.
    # (Fuses with downstream consumers under jit.)
    enc = encT[:, :B].T
    dec = decT[:, :B].T
    return enc, dec


def _init_params(key):
    """Deterministic init mimicking nn.Linear's U(-1/sqrt(fan_in), 1/sqrt(fan_in))."""
    k1, k2, k3, k4 = jax.random.split(key, 4)
    bound_enc = 1.0 / jnp.sqrt(8.0)
    bound_dec = 1.0 / jnp.sqrt(4.0)
    w_enc = jax.random.uniform(k1, (4, 8), jnp.float32, -bound_enc, bound_enc)
    b_enc = jax.random.uniform(k2, (4,), jnp.float32, -bound_enc, bound_enc)
    w_dec = jax.random.uniform(k3, (8, 4), jnp.float32, -bound_dec, bound_dec)
    b_dec = jax.random.uniform(k4, (8,), jnp.float32, -bound_dec, bound_dec)
    return w_enc, b_enc, w_dec, b_dec


def _reference(x, w_enc, b_enc, w_dec, b_dec):
    enc = jnp.tanh(x @ w_enc.T + b_enc)
    dec = jnp.tanh(enc @ w_dec.T + b_dec)
    return enc, dec


if __name__ == "__main__":
    key = jax.random.PRNGKey(0)
    k_x, k_x2, k_p = jax.random.split(key, 3)
    w_enc, b_enc, w_dec, b_dec = _init_params(k_p)

    # Small shape matching the module: (batch=2, features=8).
    batch = 2
    x = jax.random.normal(k_x, (batch, 8), jnp.float32)
    enc, dec = autoencoder_forward(x, w_enc, b_enc, w_dec, b_dec)
    jax.block_until_ready((enc, dec))

    enc_ref, dec_ref = _reference(x, w_enc, b_enc, w_dec, b_dec)
    assert enc.shape == (batch, 4) and dec.shape == (batch, 8)
    assert jnp.allclose(enc, enc_ref, atol=1e-5)
    assert jnp.allclose(dec, dec_ref, atol=1e-5)

    # Exercise the multi-tile pipelined path (grid >= 2, padded ragged batch).
    batch2 = 300
    x2 = jax.random.normal(k_x2, (batch2, 8), jnp.float32)
    enc2, dec2 = autoencoder_forward(x2, w_enc, b_enc, w_dec, b_dec, b_tile=128)
    jax.block_until_ready((enc2, dec2))
    enc2_ref, dec2_ref = _reference(x2, w_enc, b_enc, w_dec, b_dec)
    assert jnp.allclose(enc2, enc2_ref, atol=1e-5)
    assert jnp.allclose(dec2, dec2_ref, atol=1e-5)

    print("KERNEL_OK")
</pallas_src>

<mosaic_0001>
module attributes {stable_mosaic.version = 11 : i64} {
  func.func @_autoencoder_kernel(%arg0: i32, %arg1: memref<8x128xf32, #tpu.memory_space<vmem>>, %arg2: memref<4x8xf32, #tpu.memory_space<vmem>>, %arg3: memref<4x1xf32, #tpu.memory_space<vmem>>, %arg4: memref<8x4xf32, #tpu.memory_space<vmem>>, %arg5: memref<8x1xf32, #tpu.memory_space<vmem>>, %arg6: memref<4x128xf32, #tpu.memory_space<vmem>>, %arg7: memref<8x128xf32, #tpu.memory_space<vmem>>) attributes {dimension_semantics = [#tpu.dimension_semantics<parallel>], iteration_bounds = array<i64: 1>, scalar_prefetch = 0 : i64, scratch_operands = 0 : i64, tpu.core_type = #tpu.core_type<tc>, window_params = [{transform_indices = @transform_0, window_bounds = array<i64: 8, 128>}, {pipeline_mode = #tpu.pipeline_mode<synchronous>, transform_indices = @transform_1, window_bounds = array<i64: 4, 8>}, {pipeline_mode = #tpu.pipeline_mode<synchronous>, transform_indices = @transform_2, window_bounds = array<i64: 4, 1>}, {pipeline_mode = #tpu.pipeline_mode<synchronous>, transform_indices = @transform_3, window_bounds = array<i64: 8, 4>}, {pipeline_mode = #tpu.pipeline_mode<synchronous>, transform_indices = @transform_4, window_bounds = array<i64: 8, 1>}, {transform_indices = @transform_5, window_bounds = array<i64: 4, 128>}, {transform_indices = @transform_6, window_bounds = array<i64: 8, 128>}]} {
    %c0 = arith.constant 0 : index
    %c0_0 = arith.constant 0 : index
    %0 = vector.load %arg1[%c0, %c0_0] : memref<8x128xf32, #tpu.memory_space<vmem>>, vector<8x128xf32>
    %c0_1 = arith.constant 0 : index
    %c0_2 = arith.constant 0 : index
    %1 = vector.load %arg2[%c0_1, %c0_2] : memref<4x8xf32, #tpu.memory_space<vmem>>, vector<4x8xf32>
    %cst = arith.constant dense<0.000000e+00> : vector<4x128xf32>
    %2 = tpu.matmul %1, %0, %cst {dimension_numbers = #tpu.dot_dimension_numbers<[1], [0], [0], [1], [0, 0, 1, 1], [], []>} : vector<4x8xf32>, vector<8x128xf32>, vector<4x128xf32> -> vector<4x128xf32>
    %c0_3 = arith.constant 0 : index
    %c0_4 = arith.constant 0 : index
    %3 = vector.load %arg3[%c0_3, %c0_4] : memref<4x1xf32, #tpu.memory_space<vmem>>, vector<4x1xf32>
    %4 = vector.broadcast %3 : vector<4x1xf32> to vector<4x128xf32>
    %5 = arith.addf %2, %4 : vector<4x128xf32>
    %6 = math.tanh %5 : vector<4x128xf32>
    %c0_5 = arith.constant 0 : index
    %c0_6 = arith.constant 0 : index
    %7 = vector.load %arg6[%c0_5, %c0_6] : memref<4x128xf32, #tpu.memory_space<vmem>>, vector<4x128xf32>
    tpu.vector_store %arg6[%c0_5, %c0_6], %6 {strides = array<i32>} : memref<4x128xf32, #tpu.memory_space<vmem>>, vector<4x128xf32>,
    %c0_7 = arith.constant 0 : index
    %c0_8 = arith.constant 0 : index
    %8 = vector.load %arg4[%c0_7, %c0_8] : memref<8x4xf32, #tpu.memory_space<vmem>>, vector<8x4xf32>
    %cst_9 = arith.constant dense<0.000000e+00> : vector<8x128xf32>
    %9 = tpu.matmul %8, %6, %cst_9 {dimension_numbers = #tpu.dot_dimension_numbers<[1], [0], [0], [1], [0, 0, 1, 1], [], []>} : vector<8x4xf32>, vector<4x128xf32>, vector<8x128xf32> -> vector<8x128xf32>
    %c0_10 = arith.constant 0 : index
    %c0_11 = arith.constant 0 : index
    %10 = vector.load %arg5[%c0_10, %c0_11] : memref<8x1xf32, #tpu.memory_space<vmem>>, vector<8x1xf32>
    %11 = vector.broadcast %10 : vector<8x1xf32> to vector<8x128xf32>
    %12 = arith.addf %9, %11 : vector<8x128xf32>
    %13 = math.tanh %12 : vector<8x128xf32>
    %c0_12 = arith.constant 0 : index
    %c0_13 = arith.constant 0 : index
    %14 = vector.load %arg7[%c0_12, %c0_13] : memref<8x128xf32, #tpu.memory_space<vmem>>, vector<8x128xf32>
    tpu.vector_store %arg7[%c0_12, %c0_13], %13 {strides = array<i32>} : memref<8x128xf32, #tpu.memory_space<vmem>>, vector<8x128xf32>,
    return
  }
  func.func @transform_0(%arg0: i32) -> (i32, i32) {
    %c0_i32 = arith.constant 0 : i32
    %c0_i32_0 = arith.constant 0 : i32
    return %c0_i32, %arg0 : i32, i32
  }
  func.func @transform_1(%arg0: i32) -> (i32, i32) {
    %c0_i32 = arith.constant 0 : i32
    %c0_i32_0 = arith.constant 0 : i32
    %c0_i32_1 = arith.constant 0 : i32
    return %c0_i32, %c0_i32_0 : i32, i32
  }
  func.func @transform_2(%arg0: i32) -> (i32, i32) {
    %c0_i32 = arith.constant 0 : i32
    %c0_i32_0 = arith.constant 0 : i32
    %c0_i32_1 = arith.constant 0 : i32
    return %c0_i32, %c0_i32_0 : i32, i32
  }
  func.func @transform_3(%arg0: i32) -> (i32, i32) {
    %c0_i32 = arith.constant 0 : i32
    %c0_i32_0 = arith.constant 0 : i32
    %c0_i32_1 = arith.constant 0 : i32
    return %c0_i32, %c0_i32_0 : i32, i32
  }
  func.func @transform_4(%arg0: i32) -> (i32, i32) {
    %c0_i32 = arith.constant 0 : i32
    %c0_i32_0 = arith.constant 0 : i32
    %c0_i32_1 = arith.constant 0 : i32
    return %c0_i32, %c0_i32_0 : i32, i32
  }
  func.func @transform_5(%arg0: i32) -> (i32, i32) {
    %c0_i32 = arith.constant 0 : i32
    %c0_i32_0 = arith.constant 0 : i32
    return %c0_i32, %arg0 : i32, i32
  }
  func.func @transform_6(%arg0: i32) -> (i32, i32) {
    %c0_i32 = arith.constant 0 : i32
    %c0_i32_0 = arith.constant 0 : i32
    return %c0_i32, %arg0 : i32, i32
  }
}

</mosaic_0001>

<llo_original>
// kernel: autoencoder_forward.1
$region0: #{autoencoder_forward.1}
  #allocation0 [shape = 'u32[]', space=smem, size = 0x4, offset = 0x4, fixed_abs, tag = 'smem constant byte address 0x4 - core index']
  #allocation1 [shape = 'u32[144,128]{1,0:T(1,128)}', space=vmem, size = 0x12000, scoped, tag = 'internal scratch']
  %s0 = inlined_call_operand.vmem [shape: f32[8,128], index: 0, kind: input, shape index: {}]
  %s1 = inlined_call_operand.vmem [shape: f32[4,8], index: 1, kind: input, shape index: {}]
  %s2 = inlined_call_operand.vmem [shape: f32[4,1], index: 2, kind: input, shape index: {}]
  %s3 = inlined_call_operand.vmem [shape: f32[8,4], index: 3, kind: input, shape index: {}]
  %s4 = inlined_call_operand.vmem [shape: f32[8,1], index: 4, kind: input, shape index: {}]
  %s5 = inlined_call_operand.vmem [shape: f32[4,128], index: 5, kind: output, shape index: {0}]
  %s6 = inlined_call_operand.vmem [shape: f32[8,128], index: 6, kind: output, shape index: {1}]
  %7 = xla_tuple %s5, %s6
  %s8 = sld [smem:[#allocation0]]
  $region38: #{autoencoder_forward.1} parent=0
    _
  %s10 = ssub.s32 1, %s8
  %s11 = scalar_select 0, %s10, %s8
  // Predicated region
  $region2: #{autoencoder_forward.1} parent=0 // pred_check
    _
  $region3: #{autoencoder_forward.1} parent=0 // pred_check_branch
    %13 = sbr.rel (0) target = $region5
  $region4: #{autoencoder_forward.1} parent=0 // pred_region
    _
  $region5: #{autoencoder_forward.1} parent=0 // pred_fallthru
    _
  // Predicated region
  $region6: #{autoencoder_forward.1} parent=0 // pred_check
    _
  $region7: #{autoencoder_forward.1} parent=0 // pred_check_branch
    %15 = sbr.rel (0) target = $region9
  $region8: #{autoencoder_forward.1} parent=0 // pred_region
    _
  $region9: #{autoencoder_forward.1} parent=0 // pred_fallthru
    _
  // Predicated region
  $region10: #{autoencoder_forward.1} parent=0 // pred_check
    _
  $region11: #{autoencoder_forward.1} parent=0 // pred_check_branch
    %17 = sbr.rel (0) target = $region13
  $region12: #{autoencoder_forward.1} parent=0 // pred_region
    _
  $region13: #{autoencoder_forward.1} parent=0 // pred_fallthru
    _
  // Predicated region
  $region14: #{autoencoder_forward.1} parent=0 // pred_check
    _
  $region15: #{autoencoder_forward.1} parent=0 // pred_check_branch
    %19 = sbr.rel (0) target = $region17
  $region16: #{autoencoder_forward.1} parent=0 // pred_region
    _
  $region17: #{autoencoder_forward.1} parent=0 // pred_fallthru
    _
  // Predicated region
  $region18: #{autoencoder_forward.1} parent=0 // pred_check
    _
  $region19: #{autoencoder_forward.1} parent=0 // pred_check_branch
    %21 = sbr.rel (0) target = $region21
  $region20: #{autoencoder_forward.1} parent=0 // pred_region
    _
  $region21: #{autoencoder_forward.1} parent=0 // pred_fallthru
    _
  %v22 = vld [vmem:[%s0] sm:$0xff]
  %v23 = vld [vmem:[%s1] sm:$0xf]
  %v24 = vld [vmem:[%s2] sm:$0xf]
  %26 = vset.pattern.permute.xlu0 0
  %27 = vperm.xlu0 %26, %v24
  %v28 = vpop.permute.xlu0 %27
  %vm30 = vcmask 64512
  %v32 = vsel %vm30, %v23, 0
  %34 = vmatprep.subr.mxu0 0.0
  %35 = vmatpush1.msra.mxu0 %v22
  %36 = vmatprep.subr.mxu0 0.0
  %37 = vmatpush1.msra.mxu0 0.0
  %38 = vmatprep.subr.mxu0 0.0
  %39 = vmatpush1.msra.mxu0 0.0
  %40 = vmatprep.subr.mxu0 0.0
  %41 = vmatpush1.msra.mxu0 0.0
  %42 = vmatprep.subr.mxu0 0.0
  %43 = vmatpush1.msra.mxu0 0.0
  %44 = vmatprep.subr.mxu0 0.0
  %45 = vmatpush1.msra.mxu0 0.0
  %46 = vmatprep.subr.mxu0 0.0
  %47 = vmatpush1.msra.mxu0 0.0
  %48 = vmatprep.subr.mxu0 0.0
  %49 = vmatpush1.msra.mxu0 0.0
  %50 = vmatprep.subr.mxu0 0.0
  %51 = vmatpush1.msra.mxu0 0.0
  %52 = vmatprep.subr.mxu0 0.0
  %53 = vmatpush1.msra.mxu0 0.0
  %54 = vmatprep.subr.mxu0 0.0
  %55 = vmatpush1.msra.mxu0 0.0
  %56 = vmatprep.subr.mxu0 0.0
  %57 = vmatpush1.msra.mxu0 0.0
  %58 = vmatprep.subr.mxu0 0.0
  %59 = vmatpush1.msra.mxu0 0.0
  %60 = vmatprep.subr.mxu0 0.0
  %61 = vmatpush1.msra.mxu0 0.0
  %62 = vmatprep.subr.mxu0 0.0
  %63 = vmatpush1.msra.mxu0 0.0
  %64 = vmatprep.subr.mxu0 0.0
  %65 = vmatpush1.msra.mxu0 0.0
  %66 = vmatprep.subr.mxu0 0.0
  %67 = vmatpush1.msra.mxu0 0.0
  %68 = vmatprep.subr.mxu0 0.0
  %69 = vmatpush1.msra.mxu0 0.0
  %70 = vmatprep.subr.mxu0 0.0
  %71 = vmatpush1.msra.mxu0 0.0
  %72 = vmatprep.subr.mxu0 0.0
  %73 = vmatpush1.msra.mxu0 0.0
  %74 = vmatprep.subr.mxu0 0.0
  %75 = vmatpush1.msra.mxu0 0.0
  %76 = vmatprep.subr.mxu0 0.0
  %77 = vmatpush1.msra.mxu0 0.0
  %78 = vmatprep.subr.mxu0 0.0
  %79 = vmatpush1.msra.mxu0 0.0
  %80 = vmatprep.subr.mxu0 0.0
  %81 = vmatpush1.msra.mxu0 0.0
  %82 = vmatprep.subr.mxu0 0.0
  %83 = vmatpush1.msra.mxu0 0.0
  %84 = vmatprep.subr.mxu0 0.0
  %85 = vmatpush1.msra.mxu0 0.0
  %86 = vmatprep.subr.mxu0 0.0
  %87 = vmatpush1.msra.mxu0 0.0
  %88 = vmatprep.subr.mxu0 0.0
  %89 = vmatpush1.msra.mxu0 0.0
  %90 = vmatprep.subr.mxu0 0.0
  %91 = vmatpush1.msra.mxu0 0.0
  %92 = vmatprep.subr.mxu0 0.0
  %93 = vmatpush1.msra.mxu0 0.0
  %94 = vmatprep.subr.mxu0 0.0
  %95 = vmatpush1.msra.mxu0 0.0
  %96 = vmatprep.subr.mxu0 0.0
  %97 = vmatpush1.msra.mxu0 0.0
  %98 = vmatprep.mubr.f32.mxu0 0.0
  %99 = vmatmul.mubr.f32.gmra.mrb[0].mxu0 %v32
  %v100 = vpop.f32.mrb[0].mxu0
  %v101 = vadd.f32 %v28, %v100
  %v102 = vpop.f32.mrb[0].mxu0
  %103 = vdwg.mxu0
  %v104 = vtanh.pop %v101
  %105 = vst [vmem:[%s5] sm:$0xf] %v104
  %v106 = vld [vmem:[%s3] sm:$0xff]
  %v107 = vld [vmem:[%s4] sm:$0xff]
  %109 = vset.pattern.permute.xlu0 0
  %110 = vperm.xlu0 %109, %v107
  %v111 = vpop.permute.xlu0 %110
  %vm113 = vcmask 31744
  %v115 = vsel %vm113, %v106, 0
  %vm117 = vcmask 1043456
  %v119 = vsel %vm117, %v104, 0
  %121 = vmatprep.subr.mxu0 0.0
  %122 = vmatpush1.msra.mxu0 %v119
  %123 = vmatprep.subr.mxu0 0.0
  %124 = vmatpush1.msra.mxu0 0.0
  %125 = vmatprep.subr.mxu0 0.0
  %126 = vmatpush1.msra.mxu0 0.0
  %127 = vmatprep.subr.mxu0 0.0
  %128 = vmatpush1.msra.mxu0 0.0
  %129 = vmatprep.subr.mxu0 0.0
  %130 = vmatpush1.msra.mxu0 0.0
  %131 = vmatprep.subr.mxu0 0.0
  %132 = vmatpush1.msra.mxu0 0.0
  %133 = vmatprep.subr.mxu0 0.0
  %134 = vmatpush1.msra.mxu0 0.0
  %135 = vmatprep.subr.mxu0 0.0
  %136 = vmatpush1.msra.mxu0 0.0
  %137 = vmatprep.subr.mxu0 0.0
  %138 = vmatpush1.msra.mxu0 0.0
  %139 = vmatprep.subr.mxu0 0.0
  %140 = vmatpush1.msra.mxu0 0.0
  %141 = vmatprep.subr.mxu0 0.0
  %142 = vmatpush1.msra.mxu0 0.0
  %143 = vmatprep.subr.mxu0 0.0
  %144 = vmatpush1.msra.mxu0 0.0
  %145 = vmatprep.subr.mxu0 0.0
  %146 = vmatpush1.msra.mxu0 0.0
  %147 = vmatprep.subr.mxu0 0.0
  %148 = vmatpush1.msra.mxu0 0.0
  %149 = vmatprep.subr.mxu0 0.0
  %150 = vmatpush1.msra.mxu0 0.0
  %151 = vmatprep.subr.mxu0 0.0
  %152 = vmatpush1.msra.mxu0 0.0
  %153 = vmatprep.subr.mxu0 0.0
  %154 = vmatpush1.msra.mxu0 0.0
  %155 = vmatprep.subr.mxu0 0.0
  %156 = vmatpush1.msra.mxu0 0.0
  %157 = vmatprep.subr.mxu0 0.0
  %158 = vmatpush1.msra.mxu0 0.0
  %159 = vmatprep.subr.mxu0 0.0
  %160 = vmatpush1.msra.mxu0 0.0
  %161 = vmatprep.subr.mxu0 0.0
  %162 = vmatpush1.msra.mxu0 0.0
  %163 = vmatprep.subr.mxu0 0.0
  %164 = vmatpush1.msra.mxu0 0.0
  %165 = vmatprep.subr.mxu0 0.0
  %166 = vmatpush1.msra.mxu0 0.0
  %167 = vmatprep.subr.mxu0 0.0
  %168 = vmatpush1.msra.mxu0 0.0
  %169 = vmatprep.subr.mxu0 0.0
  %170 = vmatpush1.msra.mxu0 0.0
  %171 = vmatprep.subr.mxu0 0.0
  %172 = vmatpush1.msra.mxu0 0.0
  %173 = vmatprep.subr.mxu0 0.0
  %174 = vmatpush1.msra.mxu0 0.0
  %175 = vmatprep.subr.mxu0 0.0
  %176 = vmatpush1.msra.mxu0 0.0
  %177 = vmatprep.subr.mxu0 0.0
  %178 = vmatpush1.msra.mxu0 0.0
  %179 = vmatprep.subr.mxu0 0.0
  %180 = vmatpush1.msra.mxu0 0.0
  %181 = vmatprep.subr.mxu0 0.0
  %182 = vmatpush1.msra.mxu0 0.0
  %183 = vmatprep.subr.mxu0 0.0
  %184 = vmatpush1.msra.mxu0 0.0
  %185 = vmatprep.mubr.f32.mxu0 0.0
  %186 = vmatmul.mubr.f32.gmra.mrb[0].mxu0 %v115
  %v187 = vpop.f32.mrb[0].mxu0
  %v188 = vadd.f32 %v111, %v187
  %v189 = vpop.f32.mrb[0].mxu0
  %190 = vdwg.mxu0
  %v191 = vtanh.pop %v188
  %192 = vst [vmem:[%s6] sm:$0xff] %v191
  // Predicated region
  $region22: #{autoencoder_forward.1} parent=0 // pred_check
    _
  $region23: #{autoencoder_forward.1} parent=0 // pred_check_branch
    %194 = sbr.rel (0) target = $region25
  $region24: #{autoencoder_forward.1} parent=0 // pred_region
    _
  $region25: #{autoencoder_forward.1} parent=0 // pred_fallthru
    _
  // Predicated region
  $region26: #{autoencoder_forward.1} parent=0 // pred_check
    _
  $region27: #{autoencoder_forward.1} parent=0 // pred_check_branch
    %196 = sbr.rel (0) target = $region29
  $region28: #{autoencoder_forward.1} parent=0 // pred_region
    _
  $region29: #{autoencoder_forward.1} parent=0 // pred_fallthru
    _
  // Predicated region
  $region30: #{autoencoder_forward.1} parent=0 // pred_check
    _
  $region31: #{autoencoder_forward.1} parent=0 // pred_check_branch
    %198 = sbr.rel (0) target = $region33
  $region32: #{autoencoder_forward.1} parent=0 // pred_region
    _
  $region33: #{autoencoder_forward.1} parent=0 // pred_fallthru
    _
  // Predicated region
  $region34: #{autoencoder_forward.1} parent=0 // pred_check
    _
  $region35: #{autoencoder_forward.1} parent=0 // pred_check_branch
    %200 = sbr.rel (0) target = $region37
  $region36: #{autoencoder_forward.1} parent=0 // pred_region
    _
  $region37: #{autoencoder_forward.1} parent=0 // pred_fallthru
    _

</llo_original>
